<compile_context>
chip_gen: v7x
topology: tpu7x:2x2x1
jax: 0.10.0
libtpu: 0.0.40
codegen_flags: <defaults>
</compile_context>

<pallas_src>
import functools

import jax
import jax.numpy as jnp
from jax.experimental import pallas as pl
from jax.experimental.pallas import tpu as pltpu


# ----------------------------- Pallas kernel --------------------------------
def hem_test_kernel(qsum_ref, vlen_ref, user_ref, w_ref, b_ref, out_ref, *, factor):
    # qsum_ref: (E, tb)  sum over query words of word embeddings (transposed)
    # vlen_ref: (1, tb)  count of query words whose embedding row is nonzero
    # user_ref: (E, tb)  user embeddings (transposed)
    # w_ref:    (E, E)   nn.Linear weight (out, in);  y^T = W @ x^T + b
    # b_ref:    (E, 1)   nn.Linear bias
    q_mean = qsum_ref[...] / (vlen_ref[...] + 1e-6)                       # (E, tb)
    proj = jnp.dot(w_ref[...], q_mean,
                   preferred_element_type=jnp.float32) + b_ref[...]       # (E, tb)
    # personalized_model = factor * tanh(proj) + (1 - factor) * user
    out_ref[...] = factor * jnp.tanh(proj) + (1.0 - factor) * user_ref[...]


# ------------------------------ Wrapper --------------------------------------
def init_params(key, word_num, entity_num, embedding_size):
    k1, k2, k3, k4 = jax.random.split(key, 4)
    word_embed = jax.random.normal(k1, (word_num + 1, embedding_size), jnp.float32)
    # padding_idx=word_num -> that row is zero (matches nn.Embedding padding_idx)
    word_embed = word_embed.at[word_num].set(0.0)
    entity_embed = jax.random.normal(k2, (entity_num, embedding_size), jnp.float32)
    query_proj_w = jax.random.normal(k3, (embedding_size, embedding_size),
                                     jnp.float32) * 0.1
    query_proj_b = jax.random.normal(k4, (embedding_size,), jnp.float32) * 0.1
    return dict(word_embed=word_embed, entity_embed=entity_embed,
                query_proj_w=query_proj_w, query_proj_b=query_proj_b)


def hem_forward(params, users, items, query_words, mode, factor, *, tb=256):
    entity_embed = params["entity_embed"]
    word_embed = params["word_embed"]

    if mode == "output_embedding":
        return jnp.take(entity_embed, items, axis=0)

    if mode != "test":
        raise NotImplementedError(
            "train mode requires external nce_loss (not defined in module)")

    B, Q = query_words.shape
    E = word_embed.shape[1]

    # ---- Glue (fuses in XLA; nothing [B,Q,E]-sized is a pallas_call operand,
    # so it is never forced to materialize in HBM). All batch-shaped tensors
    # are produced transposed so batch is the lane dimension in the kernel.
    q_sum_t = jnp.transpose(
        jnp.sum(jnp.take(word_embed, query_words, axis=0), axis=1))          # (E, B)
    # Exact PyTorch semantics: a query word counts iff its embedding row is
    # not all-zero (true for padding_idx; ~never false for learned rows).
    word_nonzero = jnp.any(word_embed != 0.0, axis=-1).astype(jnp.float32)   # (V+1,)
    valid_len_t = jnp.sum(jnp.take(word_nonzero, query_words, axis=0),
                          axis=-1).reshape(1, B)                             # (1, B)
    user_t = jnp.transpose(jnp.take(entity_embed, users, axis=0))            # (E, B)
    w = params["query_proj_w"]                                               # (E, E)
    b = params["query_proj_b"].reshape(E, 1)                                 # (E, 1)

    # Lane tile over the batch. If B < tb use the full extent (always legal);
    # otherwise tb is a multiple of 128 so partial last blocks are fine.
    tb_eff = B if B < tb else tb
    grid = (pl.cdiv(B, tb_eff),)

    # NOTE: factor is baked in at trace time (changing it retraces).
    kernel = functools.partial(hem_test_kernel, factor=float(factor))

    out_t = pl.pallas_call(
        kernel,
        out_shape=jax.ShapeDtypeStruct((E, B), jnp.float32),
        grid_spec=pltpu.PrefetchScalarGridSpec(
            num_scalar_prefetch=0,
            grid=grid,
            in_specs=[
                pl.BlockSpec((E, tb_eff), lambda i: (0, i)),   # q_sum^T
                pl.BlockSpec((1, tb_eff), lambda i: (0, i)),   # valid_len^T
                pl.BlockSpec((E, tb_eff), lambda i: (0, i)),   # user_emb^T
                pl.BlockSpec((E, E), lambda i: (0, 0)),        # W (resident)
                pl.BlockSpec((E, 1), lambda i: (0, 0)),        # bias
            ],
            out_specs=pl.BlockSpec((E, tb_eff), lambda i: (0, i)),
        ),
        compiler_params=pltpu.CompilerParams(
            dimension_semantics=("parallel",),      # >=2 steps -> both v7x TCs
            vmem_limit_bytes=32 * 1024 * 1024,
        ),
    )(q_sum_t, valid_len_t, user_t, w, b)

    return jnp.transpose(out_t)                                              # (B, E)


# Pure-JAX reference mirroring the PyTorch forward ('test' mode).
def hem_forward_ref(params, users, items, query_words, factor):
    user_emb = jnp.take(params["entity_embed"], users, axis=0)
    q_emb = jnp.take(params["word_embed"], query_words, axis=0)
    valid_len = jnp.sum(
        (jnp.sum((q_emb != 0).astype(jnp.int32), axis=-1) != 0).astype(jnp.float32),
        axis=-1, keepdims=True)
    q_mean = jnp.sum(q_emb, axis=1) / (valid_len + 1e-6)
    q_proj = jnp.tanh(q_mean @ params["query_proj_w"].T + params["query_proj_b"])
    return factor * q_proj + (1.0 - factor) * user_emb


# -------------------------------- Main ---------------------------------------
if __name__ == "__main__":
    word_num, entity_num, embedding_size, factor = 1000, 200, 32, 0.5
    Q = 6

    key = jax.random.PRNGKey(0)
    kp, kdata = jax.random.split(key, 2)
    params = init_params(kp, word_num, entity_num, embedding_size)

    # B=512: two parallel grid steps (tb=256). B=72: single full-extent block.
    for B in (512, 72):
        ku, ki, kq = jax.random.split(jax.random.fold_in(kdata, B), 3)
        users = jax.random.randint(ku, (B,), 0, entity_num, dtype=jnp.int32)
        items = jax.random.randint(ki, (B,), 0, entity_num, dtype=jnp.int32)
        query_words = jax.random.randint(kq, (B, Q), 0, word_num, dtype=jnp.int32)
        # make the trailing positions the padding index to exercise valid_len
        query_words = query_words.at[:, Q - 2:].set(word_num)

        out = jax.block_until_ready(
            hem_forward(params, users, items, query_words, "test", factor))
        ref = hem_forward_ref(params, users, items, query_words, factor)
        assert out.shape == (B, embedding_size)
        assert jnp.allclose(out, ref, atol=1e-4, rtol=1e-4), \
            f"mismatch vs reference (B={B})"

        # also exercise output_embedding mode (glue path)
        item_emb = jax.block_until_ready(
            hem_forward(params, users, items, query_words, "output_embedding", factor))
        assert item_emb.shape == (B, embedding_size)

    print("KERNEL_OK")
</pallas_src>

<mosaic_0001>
module attributes {stable_mosaic.version = 11 : i64} {
  func.func @hem_test_kernel(%arg0: i32, %arg1: memref<32x256xf32, #tpu.memory_space<vmem>>, %arg2: memref<1x256xf32, #tpu.memory_space<vmem>>, %arg3: memref<32x256xf32, #tpu.memory_space<vmem>>, %arg4: memref<32x32xf32, #tpu.memory_space<vmem>>, %arg5: memref<32x1xf32, #tpu.memory_space<vmem>>, %arg6: memref<32x256xf32, #tpu.memory_space<vmem>>) attributes {dimension_semantics = [#tpu.dimension_semantics<parallel>], iteration_bounds = array<i64: 2>, scalar_prefetch = 0 : i64, scratch_operands = 0 : i64, tpu.core_type = #tpu.core_type<tc>, window_params = [{transform_indices = @transform_0, window_bounds = array<i64: 32, 256>}, {transform_indices = @transform_1, window_bounds = array<i64: 1, 256>}, {transform_indices = @transform_2, window_bounds = array<i64: 32, 256>}, {pipeline_mode = #tpu.pipeline_mode<synchronous>, transform_indices = @transform_3, window_bounds = array<i64: 32, 32>}, {pipeline_mode = #tpu.pipeline_mode<synchronous>, transform_indices = @transform_4, window_bounds = array<i64: 32, 1>}, {transform_indices = @transform_5, window_bounds = array<i64: 32, 256>}]} {
    %c0 = arith.constant 0 : index
    %c0_0 = arith.constant 0 : index
    %0 = vector.load %arg1[%c0, %c0_0] : memref<32x256xf32, #tpu.memory_space<vmem>>, vector<32x256xf32>
    %c0_1 = arith.constant 0 : index
    %c0_2 = arith.constant 0 : index
    %1 = vector.load %arg2[%c0_1, %c0_2] : memref<1x256xf32, #tpu.memory_space<vmem>>, vector<1x256xf32>
    %cst = arith.constant 9.99999997E-7 : f32
    %2 = vector.broadcast %cst : f32 to vector<1x256xf32>
    %3 = arith.addf %1, %2 : vector<1x256xf32>
    %4 = vector.broadcast %3 : vector<1x256xf32> to vector<32x256xf32>
    %5 = arith.divf %0, %4 : vector<32x256xf32>
    %c0_3 = arith.constant 0 : index
    %c0_4 = arith.constant 0 : index
    %6 = vector.load %arg4[%c0_3, %c0_4] : memref<32x32xf32, #tpu.memory_space<vmem>>, vector<32x32xf32>
    %cst_5 = arith.constant dense<0.000000e+00> : vector<32x256xf32>
    %7 = tpu.matmul %6, %5, %cst_5 {dimension_numbers = #tpu.dot_dimension_numbers<[1], [0], [0], [1], [0, 0, 1, 1], [], []>} : vector<32x32xf32>, vector<32x256xf32>, vector<32x256xf32> -> vector<32x256xf32>
    %c0_6 = arith.constant 0 : index
    %c0_7 = arith.constant 0 : index
    %8 = vector.load %arg5[%c0_6, %c0_7] : memref<32x1xf32, #tpu.memory_space<vmem>>, vector<32x1xf32>
    %9 = vector.broadcast %8 : vector<32x1xf32> to vector<32x256xf32>
    %10 = arith.addf %7, %9 : vector<32x256xf32>
    %11 = math.tanh %10 : vector<32x256xf32>
    %cst_8 = arith.constant 5.000000e-01 : f32
    %12 = vector.broadcast %cst_8 : f32 to vector<32x256xf32>
    %13 = arith.mulf %12, %11 : vector<32x256xf32>
    %c0_9 = arith.constant 0 : index
    %c0_10 = arith.constant 0 : index
    %14 = vector.load %arg3[%c0_9, %c0_10] : memref<32x256xf32, #tpu.memory_space<vmem>>, vector<32x256xf32>
    %cst_11 = arith.constant 5.000000e-01 : f32
    %15 = vector.broadcast %cst_11 : f32 to vector<32x256xf32>
    %16 = arith.mulf %15, %14 : vector<32x256xf32>
    %17 = arith.addf %13, %16 : vector<32x256xf32>
    %c0_12 = arith.constant 0 : index
    %c0_13 = arith.constant 0 : index
    %18 = vector.load %arg6[%c0_12, %c0_13] : memref<32x256xf32, #tpu.memory_space<vmem>>, vector<32x256xf32>
    tpu.vector_store %arg6[%c0_12, %c0_13], %17 {strides = array<i32>} : memref<32x256xf32, #tpu.memory_space<vmem>>, vector<32x256xf32>,
    return
  }
  func.func @transform_0(%arg0: i32) -> (i32, i32) {
    %c0_i32 = arith.constant 0 : i32
    %c0_i32_0 = arith.constant 0 : i32
    return %c0_i32, %arg0 : i32, i32
  }
  func.func @transform_1(%arg0: i32) -> (i32, i32) {
    %c0_i32 = arith.constant 0 : i32
    %c0_i32_0 = arith.constant 0 : i32
    return %c0_i32, %arg0 : i32, i32
  }
  func.func @transform_2(%arg0: i32) -> (i32, i32) {
    %c0_i32 = arith.constant 0 : i32
    %c0_i32_0 = arith.constant 0 : i32
    return %c0_i32, %arg0 : i32, i32
  }
  func.func @transform_3(%arg0: i32) -> (i32, i32) {
    %c0_i32 = arith.constant 0 : i32
    %c0_i32_0 = arith.constant 0 : i32
    %c0_i32_1 = arith.constant 0 : i32
    return %c0_i32, %c0_i32_0 : i32, i32
  }
  func.func @transform_4(%arg0: i32) -> (i32, i32) {
    %c0_i32 = arith.constant 0 : i32
    %c0_i32_0 = arith.constant 0 : i32
    %c0_i32_1 = arith.constant 0 : i32
    return %c0_i32, %c0_i32_0 : i32, i32
  }
  func.func @transform_5(%arg0: i32) -> (i32, i32) {
    %c0_i32 = arith.constant 0 : i32
    %c0_i32_0 = arith.constant 0 : i32
    return %c0_i32, %arg0 : i32, i32
  }
}

</mosaic_0001>

<llo_original>
// kernel: tpu_custom_call.1
$region0: #{tpu_custom_call.1}
  #allocation0 [shape = 'u32[]', space=smem, size = 0x4, offset = 0x4, fixed_abs, tag = 'smem constant byte address 0x4 - core index']
  #allocation1 [shape = 'u32[144,128]{1,0:T(1,128)}', space=vmem, size = 0x12000, scoped, tag = 'internal scratch']
  %s0 = inlined_call_operand.hbm [shape: f32[32,512], index: 0, kind: input, shape index: {}]
  %s1 = inlined_call_operand.vmem [shape: f32[1,512], index: 1, kind: input, shape index: {}]
  %s2 = inlined_call_operand.hbm [shape: f32[32,512], index: 2, kind: input, shape index: {}]
  %s3 = inlined_call_operand.vmem [shape: f32[32,32], index: 3, kind: input, shape index: {}]
  %s4 = inlined_call_operand.vmem [shape: f32[32,1], index: 4, kind: input, shape index: {}]
  %s5 = inlined_call_operand.hbm [shape: f32[32,512], index: 5, kind: output, shape index: {}]
  %s6 = sld [smem:[#allocation0]]
  $region61: #{tpu_custom_call.1} parent=0
    _
  %s8 = ssub.s32 1, %s6
  %s9 = scalar_select 0, %s8, %s6
  $region1: #{tpu_custom_call.1} parent=0
    #allocation2 [shape = 'u8[65536]{0}', space=vmem, size = 0x10000, scoped, tag = 'input window, operand 0']
    #allocation3 [shape = 's32[2]{0}', space=sflag, size = 0x8, scoped, tag = 'scoped memory for tpu_custom_call.1']
    #allocation4 [shape = 's32[2]{0}', space=sflag, size = 0x8, scoped, tag = 'scoped memory for tpu_custom_call.1']
    #allocation5 [shape = 'u8[65536]{0}', space=vmem, size = 0x10000, scoped, tag = 'input window, operand 2']
    #allocation6 [shape = 's32[2]{0}', space=sflag, size = 0x8, scoped, tag = 'scoped memory for tpu_custom_call.1']
    #allocation7 [shape = 'u8[65536]{0}', space=vmem, size = 0x10000, scoped, tag = 'output window, operand 0']
    %10 = vsyncpa [#allocation3], 0
    %s11 = scalar_lea.sflag [#allocation3], 1
    %12 = vsyncpa %s11, 0
    %13 = vsyncpa [#allocation6], 0
    %s14 = scalar_lea.sflag [#allocation6], 1
    %15 = vsyncpa %s14, 0
    %16 = vsyncpa [#allocation4], 0
    %s17 = scalar_lea.sflag [#allocation4], 1
    %18 = vsyncpa %s17, 0
    loop: start=0, step=1, limit=4
    $region2: #{tpu_custom_call.1} parent=1 // loop_pre_header
      _
    $region3: #{tpu_custom_call.1} parent=1 // loop_header
      %s20 = sphi 0, %s24
      %p21 = scmp.ge.s32.totalorder %s20, 4
      %s30 = sphi 0, %s32
      %s33 = sphi 0, %s30
      %s34 = sphi 0, %s33
      %s50 = sphi 0, %s34
      %s56 = sphi 0, %s58
      %s59 = sphi 0, %s56
      %s60 = sphi 0, %s59
      %s76 = sphi 0, %s60
      %s82 = sphi 0, %s84
      %s85 = sphi 0, %s82
      %s86 = sphi 0, %s85
      %s102 = sphi 0, %s86
      %s106 = sphi 0, %s106
      %s108 = sphi 0, %s106
      %s109 = sphi 0, %s108
      %s123 = sphi 0, %s109
      %s127 = sphi 0, %s127
      %s129 = sphi 0, %s127
      %s130 = sphi 0, %s129
      %s144 = sphi 0, %s130
      %s150 = sphi 0, %s152
      %s153 = sphi 0, %s150
      %s154 = sphi 0, %s153
      %s170 = sphi 0, %s154
    $region4: #{tpu_custom_call.1} parent=1 // loop_header_branch
      %23 = sbr.rel (%p21) target = $region8
    $region5: #{tpu_custom_call.1} parent=1 // loop_body
      %s25 = ssub.s32 %s20, 1
      %s26 = ssub.s32 %s20, 2
      %s27 = sadd.s32 %s20, 1
      %s28 = ssub.s32 %s20, %s27
      %p29 = scmp.eq.s32.totalorder %s28, 0
      %s31 = sadd.s32 %s30, 1
      %s32 = scalar_select %p29, %s30, %s31
      %p35 = pneg %p29
      %p36 = scmp.eq.s32.totalorder %s20, 1
      %p37 = por %p35, %p36
      %p38 = scmp.ne.s32.totalorder %s30, %s33
      %p39 = scmp.eq.s32.totalorder %s20, 0
      %p40 = por %p38, %p39
      %p41 = scmp.ne.s32.totalorder %s30, %s33
      %p42 = scmp.eq.s32.totalorder %s25, 1
      %p43 = por %p41, %p42
      %p44 = scmp.ne.s32.totalorder %s33, %s34
      %p45 = scmp.eq.s32.totalorder %s25, 0
      %p46 = por %p44, %p45
      %p47 = scmp.ne.s32.totalorder %s33, %s34
      %p48 = scmp.eq.s32.totalorder %s26, 1
      %p49 = por %p47, %p48
      %p51 = scmp.ne.s32.totalorder %s34, %s50
      %p52 = scmp.eq.s32.totalorder %s26, 0
      %p53 = por %p51, %p52
      %s54 = ssub.s32 %s20, %s27
      %p55 = scmp.eq.s32.totalorder %s54, 0
      %s57 = sadd.s32 %s56, 1
      %s58 = scalar_select %p55, %s56, %s57
      %p61 = pneg %p55
      %p62 = scmp.eq.s32.totalorder %s20, 1
      %p63 = por %p61, %p62
      %p64 = scmp.ne.s32.totalorder %s56, %s59
      %p65 = scmp.eq.s32.totalorder %s20, 0
      %p66 = por %p64, %p65
      %p67 = scmp.ne.s32.totalorder %s56, %s59
      %p68 = scmp.eq.s32.totalorder %s25, 1
      %p69 = por %p67, %p68
      %p70 = scmp.ne.s32.totalorder %s59, %s60
      %p71 = scmp.eq.s32.totalorder %s25, 0
      %p72 = por %p70, %p71
      %p73 = scmp.ne.s32.totalorder %s59, %s60
      %p74 = scmp.eq.s32.totalorder %s26, 1
      %p75 = por %p73, %p74
      %p77 = scmp.ne.s32.totalorder %s60, %s76
      %p78 = scmp.eq.s32.totalorder %s26, 0
      %p79 = por %p77, %p78
      %s80 = ssub.s32 %s20, %s27
      %p81 = scmp.eq.s32.totalorder %s80, 0
      %s83 = sadd.s32 %s82, 1
      %s84 = scalar_select %p81, %s82, %s83
      %p87 = pneg %p81
      %p88 = scmp.eq.s32.totalorder %s20, 1
      %p89 = por %p87, %p88
      %p90 = scmp.ne.s32.totalorder %s82, %s85
      %p91 = scmp.eq.s32.totalorder %s20, 0
      %p92 = por %p90, %p91
      %p93 = scmp.ne.s32.totalorder %s82, %s85
      %p94 = scmp.eq.s32.totalorder %s25, 1
      %p95 = por %p93, %p94
      %p96 = scmp.ne.s32.totalorder %s85, %s86
      %p97 = scmp.eq.s32.totalorder %s25, 0
      %p98 = por %p96, %p97
      %p99 = scmp.ne.s32.totalorder %s85, %s86
      %p100 = scmp.eq.s32.totalorder %s26, 1
      %p101 = por %p99, %p100
      %p103 = scmp.ne.s32.totalorder %s86, %s102
      %p104 = scmp.eq.s32.totalorder %s26, 0
      %p105 = por %p103, %p104
      %s107 = sadd.s32 %s106, 1
      %p110 = scmp.eq.s32.totalorder %s20, 1
      %p111 = scmp.ne.s32.totalorder %s106, %s108
      %p112 = scmp.eq.s32.totalorder %s20, 0
      %p113 = por %p111, %p112
      %p114 = scmp.ne.s32.totalorder %s106, %s108
      %p115 = scmp.eq.s32.totalorder %s25, 1
      %p116 = por %p114, %p115
      %p117 = scmp.ne.s32.totalorder %s108, %s109
      %p118 = scmp.eq.s32.totalorder %s25, 0
      %p119 = por %p117, %p118
      %p120 = scmp.ne.s32.totalorder %s108, %s109
      %p121 = scmp.eq.s32.totalorder %s26, 1
      %p122 = por %p120, %p121
      %p124 = scmp.ne.s32.totalorder %s109, %s123
      %p125 = scmp.eq.s32.totalorder %s26, 0
      %p126 = por %p124, %p125
      %s128 = sadd.s32 %s127, 1
      %p131 = scmp.eq.s32.totalorder %s20, 1
      %p132 = scmp.ne.s32.totalorder %s127, %s129
      %p133 = scmp.eq.s32.totalorder %s20, 0
      %p134 = por %p132, %p133
      %p135 = scmp.ne.s32.totalorder %s127, %s129
      %p136 = scmp.eq.s32.totalorder %s25, 1
      %p137 = por %p135, %p136
      %p138 = scmp.ne.s32.totalorder %s129, %s130
      %p139 = scmp.eq.s32.totalorder %s25, 0
      %p140 = por %p138, %p139
      %p141 = scmp.ne.s32.totalorder %s129, %s130
      %p142 = scmp.eq.s32.totalorder %s26, 1
      %p143 = por %p141, %p142
      %p145 = scmp.ne.s32.totalorder %s130, %s144
      %p146 = scmp.eq.s32.totalorder %s26, 0
      %p147 = por %p145, %p146
      %s148 = ssub.s32 %s20, %s27
      %p149 = scmp.eq.s32.totalorder %s148, 0
      %s151 = sadd.s32 %s150, 1
      %s152 = scalar_select %p149, %s150, %s151
      %p155 = pneg %p149
      %p156 = scmp.eq.s32.totalorder %s20, 1
      %p157 = por %p155, %p156
      %p158 = scmp.ne.s32.totalorder %s150, %s153
      %p159 = scmp.eq.s32.totalorder %s20, 0
      %p160 = por %p158, %p159
      %p161 = scmp.ne.s32.totalorder %s150, %s153
      %p162 = scmp.eq.s32.totalorder %s25, 1
      %p163 = por %p161, %p162
      %p164 = scmp.ne.s32.totalorder %s153, %s154
      %p165 = scmp.eq.s32.totalorder %s25, 0
      %p166 = por %p164, %p165
      %p167 = scmp.ne.s32.totalorder %s153, %s154
      %p168 = scmp.eq.s32.totalorder %s26, 1
      %p169 = por %p167, %p168
      %p171 = scmp.ne.s32.totalorder %s154, %s170
      %p172 = scmp.eq.s32.totalorder %s26, 0
      %p173 = por %p171, %p172
      %p174 = scmp.le.s32.totalorder 1, %s20
      %p175 = scmp.lt.s32.totalorder %s20, 3
      %p176 = pnand %p174, %p175
      %p177 = pneg %p176
      // Predicated region
      $region9: #{tpu_custom_call.1} parent=5 // pred_check
        _
      $region10: #{tpu_custom_call.1} parent=5 // pred_check_branch
        %179 = sbr.rel (%p176) target = $region12
      $region11: #{tpu_custom_call.1} parent=5 // pred_region
        %s180 = ssub.s32 %s20, 1
        // Predicated region
        $region13: #{tpu_custom_call.1} parent=11 // pred_check
          %p181 = pneg %p119
        $region14: #{tpu_custom_call.1} parent=11 // pred_check_branch
          %183 = sbr.rel (%p181) target = $region16
        $region15: #{tpu_custom_call.1} parent=11 // pred_region
          _
        $region16: #{tpu_custom_call.1} parent=11 // pred_fallthru
          _
        // Predicated region
        $region17: #{tpu_custom_call.1} parent=11 // pred_check
          %p184 = pneg %p140
        $region18: #{tpu_custom_call.1} parent=11 // pred_check_branch
          %186 = sbr.rel (%p184) target = $region20
        $region19: #{tpu_custom_call.1} parent=11 // pred_region
          _
        $region20: #{tpu_custom_call.1} parent=11 // pred_fallthru
          _
      $region12: #{tpu_custom_call.1} parent=5 // pred_fallthru
        _
      %p187 = scmp.lt.s32.totalorder %s20, 2
      // Predicated region
      $region21: #{tpu_custom_call.1} parent=5 // pred_check
        %p188 = pneg %p187
      $region22: #{tpu_custom_call.1} parent=5 // pred_check_branch
        %190 = sbr.rel (%p188) target = $region24
      $region23: #{tpu_custom_call.1} parent=5 // pred_region
        // Predicated region
        $region25: #{tpu_custom_call.1} parent=23 // pred_check
          %p191 = pneg %p40
        $region26: #{tpu_custom_call.1} parent=23 // pred_check_branch
          %193 = sbr.rel (%p191) target = $region28
        $region27: #{tpu_custom_call.1} parent=23 // pred_region
          %s194 = sand.u32 %s30, 1
          %s195 = scalar_lea.sflag [#allocation3], %s194
          %s196 = sand.u32 %s30, 1
          %s197 = smul.addr %s196, 64
          %s198 = scalar_lea.vmem [#allocation2], %s197
          %s199 = smul.u32 2, %s20
          %s201 = ssub.s32 1024, 1024
          %202 = vsyncadd %s195, %s201
          %s203 = smul.addr %s199, 128
          %s204 = scalar_lea.hbm %s0, %s203
          %s205 = sshll.u32 %s198, 4
          %s206 = int_to_ptr.vmem [resolvable:$true] %s205
          %211 = dma.hbm_to_vmem [thread:$0]  %s204, 1024, %s206, %s195, 512, 256, 16
        $region28: #{tpu_custom_call.1} parent=23 // pred_fallthru
          _
        // Predicated region
        $region29: #{tpu_custom_call.1} parent=23 // pred_check
          %p212 = pneg %p66
        $region30: #{tpu_custom_call.1} parent=23 // pred_check_branch
          %214 = sbr.rel (%p212) target = $region32
        $region31: #{tpu_custom_call.1} parent=23 // pred_region
          %s215 = smul.u32 2, %s20
          %p216 = scmp.lt.s32.totalorder %s215, 3
          %s217 = scalar_select %p216, %s215, 3
          %s218 = scalar_lea.vmem %s1, %s217
          %s219 = smul.u32 2, %s20
        $region32: #{tpu_custom_call.1} parent=23 // pred_fallthru
          _
        // Predicated region
        $region33: #{tpu_custom_call.1} parent=23 // pred_check
          %p220 = pneg %p92
        $region34: #{tpu_custom_call.1} parent=23 // pred_check_branch
          %222 = sbr.rel (%p220) target = $region36
        $region35: #{tpu_custom_call.1} parent=23 // pred_region
          %s223 = sand.u32 %s82, 1
          %s224 = scalar_lea.sflag [#allocation6], %s223
          %s225 = sand.u32 %s82, 1
          %s226 = smul.addr %s225, 64
          %s227 = scalar_lea.vmem [#allocation5], %s226
          %s228 = smul.u32 2, %s20
          %s230 = ssub.s32 1024, 1024
          %231 = vsyncadd %s224, %s230
          %s232 = smul.addr %s228, 128
          %s233 = scalar_lea.hbm %s2, %s232
          %s234 = sshll.u32 %s227, 4
          %s235 = int_to_ptr.vmem [resolvable:$true] %s234
          %240 = dma.hbm_to_vmem [thread:$0]  %s233, 1024, %s235, %s224, 512, 256, 16
        $region36: #{tpu_custom_call.1} parent=23 // pred_fallthru
          _
      $region24: #{tpu_custom_call.1} parent=5 // pred_fallthru
        _
      %p241 = scmp.le.s32.totalorder 1, %s20
      %p242 = scmp.lt.s32.totalorder %s20, 3
      %p243 = pnand %p241, %p242
      %p244 = pneg %p243
      // Predicated region
      $region37: #{tpu_custom_call.1} parent=5 // pred_check
        _
      $region38: #{tpu_custom_call.1} parent=5 // pred_check_branch
        %246 = sbr.rel (%p243) target = $region40
      $region39: #{tpu_custom_call.1} parent=5 // pred_region
        %s247 = ssub.s32 %s20, 1
        %s248 = sand.u32 %s33, 1
        %s249 = scalar_lea.sflag [#allocation3], %s248
        %s250 = sand.u32 %s33, 1
        %s251 = smul.addr %s250, 64
        %s252 = scalar_lea.vmem [#allocation2], %s251
        // Predicated region
        $region41: #{tpu_custom_call.1} parent=39 // pred_check
          %p253 = pneg %p46
        $region42: #{tpu_custom_call.1} parent=39 // pred_check_branch
          %255 = sbr.rel (%p253) target = $region44
        $region43: #{tpu_custom_call.1} parent=39 // pred_region
          %256 = dma.done %s249, 1024
        $region44: #{tpu_custom_call.1} parent=39 // pred_fallthru
          _
        %s257 = sand.u32 %s85, 1
        %s258 = scalar_lea.sflag [#allocation6], %s257
        %s259 = sand.u32 %s85, 1
        %s260 = smul.addr %s259, 64
        %s261 = scalar_lea.vmem [#allocation5], %s260
        // Predicated region
        $region45: #{tpu_custom_call.1} parent=39 // pred_check
          %p262 = pneg %p98
        $region46: #{tpu_custom_call.1} parent=39 // pred_check_branch
          %264 = sbr.rel (%p262) target = $region48
        $region47: #{tpu_custom_call.1} parent=39 // pred_region
          %265 = dma.done %s258, 1024
        $region48: #{tpu_custom_call.1} parent=39 // pred_fallthru
          _
        %s266 = sand.u32 %s33, 1
        %s267 = scalar_lea.sflag [#allocation3], %s266
        %s268 = sand.u32 %s33, 1
        %s269 = smul.addr %s268, 64
        %s270 = scalar_lea.vmem [#allocation2], %s269
        %p271 = pneg %p46
        %p272 = pneg %p43
        %s273 = smul.u32 2, %s25
        %p274 = scmp.lt.s32.totalorder %s273, 3
        %s275 = scalar_select %p274, %s273, 3
        %s276 = scalar_lea.vmem %s1, %s275
        %p277 = pneg %p72
        %p278 = pneg %p69
        %s279 = sand.u32 %s85, 1
        %s280 = scalar_lea.sflag [#allocation6], %s279
        %s281 = sand.u32 %s85, 1
        %s282 = smul.addr %s281, 64
        %s283 = scalar_lea.vmem [#allocation5], %s282
        %p284 = pneg %p98
        %p285 = pneg %p95
        %p286 = pneg %p119
        %p287 = pneg %p116
        %p288 = pneg %p140
        %p289 = pneg %p137
        %p290 = pneg %p166
        %p291 = pneg %p163
        %s292 = sand.u32 %s153, 1
        %s293 = scalar_lea.sflag [#allocation4], %s292
        %s294 = sand.u32 %s153, 1
        %s295 = smul.addr %s294, 64
        %s296 = scalar_lea.vmem [#allocation7], %s295
        %s297 = smul.u32 2, %s25
        %s298 = smul.u32 2, %s25
        %p299 = scmp.lt.s32.totalorder %s298, 3
        %s300 = scalar_select %p299, %s298, 3
        %s301 = scalar_lea.vmem %s1, %s300
        %s302 = smul.u32 2, %s25
        %s303 = smul.u32 2, %s25
        %s304 = smul.u32 2, %s25
        %v305 = vld [vmem:[%s252] sm:$0xff]
        %v306 = vld [vmem:[%s252 + $0x8] sm:$0xff]
        %v307 = vld [vmem:[%s252 + $0x10] sm:$0xff]
        %v308 = vld [vmem:[%s252 + $0x18] sm:$0xff]
        %v309 = vld [vmem:[%s252 + $0x20] sm:$0xff]
        %v310 = vld [vmem:[%s252 + $0x28] sm:$0xff]
        %v311 = vld [vmem:[%s252 + $0x30] sm:$0xff]
        %v312 = vld [vmem:[%s252 + $0x38] sm:$0xff]
        %v313 = vld [vmem:[%s301] sm:$0x3]
        %v314 = vadd.f32 %v313, 1e-06
        %v316 = vlaneseq
        %v317 = vshrl.u32 %v316, 7
        %v318 = vsub.s32 0, %v317
        %v319 = vrot.slane %v314, %v318
        %v320 = vlaneseq
        %v321 = vshrl.u32 %v320, 7
        %v322 = vsub.s32 1, %v321
        %v323 = vrot.slane %v314, %v322
        %v326 = vrcp.pop %v319
        %v327 = vmul.f32 %v305, %v326
        %v328 = vrcp.pop %v323
        %v329 = vmul.f32 %v306, %v328
        %v330 = vmul.f32 %v307, %v326
        %v331 = vmul.f32 %v308, %v328
        %v332 = vmul.f32 %v309, %v326
        %v333 = vmul.f32 %v310, %v328
        %v334 = vmul.f32 %v311, %v326
        %v335 = vmul.f32 %v312, %v328
        %v336 = vld [vmem:[%s3] sm:$0xff]
        %v337 = vld [vmem:[%s3 + $0x8] sm:$0xff]
        %v338 = vld [vmem:[%s3 + $0x10] sm:$0xff]
        %v339 = vld [vmem:[%s3 + $0x18] sm:$0xff]
        %v340 = vld [vmem:[%s4] sm:$0xff]
        %v341 = vld [vmem:[%s4 + $0x8] sm:$0xff]
        %v342 = vld [vmem:[%s4 + $0x10] sm:$0xff]
        %v343 = vld [vmem:[%s4 + $0x18] sm:$0xff]
        %345 = vset.pattern.permute.xlu0 0
        %346 = vperm.xlu0 %345, %v340
        %v347 = vpop.permute.xlu0 %346
        %350 = vset.pattern.permute.xlu0 0
        %351 = vperm.xlu0 %350, %v341
        %v352 = vpop.permute.xlu0 %351
        %355 = vset.pattern.permute.xlu0 0
        %356 = vperm.xlu0 %355, %v342
        %v357 = vpop.permute.xlu0 %356
        %360 = vset.pattern.permute.xlu0 0
        %361 = vperm.xlu0 %360, %v343
        %v362 = vpop.permute.xlu0 %361
        %vm364 = vcmask 261120
        %v366 = vsel %vm364, %v336, 0
        %v369 = vsel %vm364, %v337, 0
        %v372 = vsel %vm364, %v338, 0
        %v375 = vsel %vm364, %v339, 0
        %377 = vmatprep.subr.mxu0 %v329
        %378 = vmatpush1.msra.mxu0 %v327
        %379 = vmatprep.subr.mxu0 %v331
        %380 = vmatpush1.msra.mxu0 %v330
        %381 = vmatprep.subr.mxu0 %v333
        %382 = vmatpush1.msra.mxu0 %v332
        %383 = vmatprep.subr.mxu0 %v335
        %384 = vmatpush1.msra.mxu0 %v334
        %385 = vmatprep.subr.mxu0 0.0
        %386 = vmatpush1.msra.mxu0 0.0
        %387 = vmatprep.subr.mxu0 0.0
        %388 = vmatpush1.msra.mxu0 0.0
        %389 = vmatprep.subr.mxu0 0.0
        %390 = vmatpush1.msra.mxu0 0.0
        %391 = vmatprep.subr.mxu0 0.0
        %392 = vmatpush1.msra.mxu0 0.0
        %393 = vmatprep.subr.mxu0 0.0
        %394 = vmatpush1.msra.mxu0 0.0
        %395 = vmatprep.subr.mxu0 0.0
        %396 = vmatpush1.msra.mxu0 0.0
        %397 = vmatprep.subr.mxu0 0.0
        %398 = vmatpush1.msra.mxu0 0.0
        %399 = vmatprep.subr.mxu0 0.0
        %400 = vmatpush1.msra.mxu0 0.0
        %401 = vmatprep.subr.mxu0 0.0
        %402 = vmatpush1.msra.mxu0 0.0
        %403 = vmatprep.subr.mxu0 0.0
        %404 = vmatpush1.msra.mxu0 0.0
        %405 = vmatprep.subr.mxu0 0.0
        %406 = vmatpush1.msra.mxu0 0.0
        %407 = vmatprep.subr.mxu0 0.0
        %408 = vmatpush1.msra.mxu0 0.0
        %409 = vmatprep.subr.mxu0 0.0
        %410 = vmatpush1.msra.mxu0 0.0
        %411 = vmatprep.subr.mxu0 0.0
        %412 = vmatpush1.msra.mxu0 0.0
        %413 = vmatprep.subr.mxu0 0.0
        %414 = vmatpush1.msra.mxu0 0.0
        %415 = vmatprep.subr.mxu0 0.0
        %416 = vmatpush1.msra.mxu0 0.0
        %417 = vmatprep.subr.mxu0 0.0
        %418 = vmatpush1.msra.mxu0 0.0
        %419 = vmatprep.subr.mxu0 0.0
        %420 = vmatpush1.msra.mxu0 0.0
        %421 = vmatprep.subr.mxu0 0.0
        %422 = vmatpush1.msra.mxu0 0.0
        %423 = vmatprep.subr.mxu0 0.0
        %424 = vmatpush1.msra.mxu0 0.0
        %425 = vmatprep.subr.mxu0 0.0
        %426 = vmatpush1.msra.mxu0 0.0
        %427 = vmatprep.subr.mxu0 0.0
        %428 = vmatpush1.msra.mxu0 0.0
        %429 = vmatprep.subr.mxu0 0.0
        %430 = vmatpush1.msra.mxu0 0.0
        %431 = vmatprep.subr.mxu0 0.0
        %432 = vmatpush1.msra.mxu0 0.0
        %433 = vmatprep.subr.mxu0 0.0
        %434 = vmatpush1.msra.mxu0 0.0
        %435 = vmatprep.subr.mxu0 0.0
        %436 = vmatpush1.msra.mxu0 0.0
        %437 = vmatprep.subr.mxu0 0.0
        %438 = vmatpush1.msra.mxu0 0.0
        %439 = vmatprep.subr.mxu0 0.0
        %440 = vmatpush1.msra.mxu0 0.0
        %441 = vmatprep.mubr.f32.mxu0 0.0
        %442 = vmatmul.mubr.f32.gmra.mrb[0].mxu0 %v366
        %v443 = vpop.f32.mrb[0].mxu0
        %v444 = vadd.f32 %v347, %v443
        %v445 = vpop.f32.mrb[0].mxu0
        %v446 = vadd.f32 %v347, %v445
        %447 = vmatprep.mubr.f32.mxu0 0.0
        %448 = vmatmul.mubr.f32.gmra.mrb[0].mxu0 %v369
        %v449 = vpop.f32.mrb[0].mxu0
        %v450 = vadd.f32 %v352, %v449
        %v451 = vpop.f32.mrb[0].mxu0
        %v452 = vadd.f32 %v352, %v451
        %453 = vmatprep.mubr.f32.mxu0 0.0
        %454 = vmatmul.mubr.f32.gmra.mrb[0].mxu0 %v372
        %v455 = vpop.f32.mrb[0].mxu0
        %v456 = vadd.f32 %v357, %v455
        %v457 = vpop.f32.mrb[0].mxu0
        %v458 = vadd.f32 %v357, %v457
        %459 = vmatprep.mubr.f32.mxu0 0.0
        %460 = vmatmul.mubr.f32.gmra.mrb[0].mxu0 %v375
        %v461 = vpop.f32.mrb[0].mxu0
        %v462 = vadd.f32 %v362, %v461
        %v463 = vpop.f32.mrb[0].mxu0
        %v464 = vadd.f32 %v362, %v463
        %465 = vdwg.mxu0
        %v466 = vtanh.pop %v444
        %v467 = vtanh.pop %v446
        %v468 = vtanh.pop %v450
        %v469 = vtanh.pop %v452
        %v470 = vtanh.pop %v456
        %v471 = vtanh.pop %v458
        %v472 = vtanh.pop %v462
        %v473 = vtanh.pop %v464
        %v474 = vmul.f32 %v466, 0.5
        %v475 = vmul.f32 %v467, 0.5
        %v476 = vmul.f32 %v468, 0.5
        %v477 = vmul.f32 %v469, 0.5
        %v478 = vmul.f32 %v470, 0.5
        %v479 = vmul.f32 %v471, 0.5
        %v480 = vmul.f32 %v472, 0.5
        %v481 = vmul.f32 %v473, 0.5
        %v482 = vld [vmem:[%s261] sm:$0xff]
        %v483 = vld [vmem:[%s261 + $0x8] sm:$0xff]
        %v484 = vld [vmem:[%s261 + $0x10] sm:$0xff]
        %v485 = vld [vmem:[%s261 + $0x18] sm:$0xff]
        %v486 = vld [vmem:[%s261 + $0x20] sm:$0xff]
        %v487 = vld [vmem:[%s261 + $0x28] sm:$0xff]
        %v488 = vld [vmem:[%s261 + $0x30] sm:$0xff]
        %v489 = vld [vmem:[%s261 + $0x38] sm:$0xff]
        %v490 = vmul.f32 %v482, 0.5
        %v491 = vmul.f32 %v483, 0.5
        %v492 = vmul.f32 %v484, 0.5
        %v493 = vmul.f32 %v485, 0.5
        %v494 = vmul.f32 %v486, 0.5
        %v495 = vmul.f32 %v487, 0.5
        %v496 = vmul.f32 %v488, 0.5
        %v497 = vmul.f32 %v489, 0.5
        %v498 = vadd.f32 %v474, %v490
        %v499 = vadd.f32 %v475, %v491
        %v500 = vadd.f32 %v476, %v492
        %v501 = vadd.f32 %v477, %v493
        %v502 = vadd.f32 %v478, %v494
        %v503 = vadd.f32 %v479, %v495
        %v504 = vadd.f32 %v480, %v496
        %v505 = vadd.f32 %v481, %v497
        %506 = vst [vmem:[%s296] sm:$0xff] %v498
        %507 = vst [vmem:[%s296 + $0x8] sm:$0xff] %v499
        %508 = vst [vmem:[%s296 + $0x10] sm:$0xff] %v500
        %509 = vst [vmem:[%s296 + $0x18] sm:$0xff] %v501
        %510 = vst [vmem:[%s296 + $0x20] sm:$0xff] %v502
        %511 = vst [vmem:[%s296 + $0x28] sm:$0xff] %v503
        %512 = vst [vmem:[%s296 + $0x30] sm:$0xff] %v504
        %513 = vst [vmem:[%s296 + $0x38] sm:$0xff] %v505
        %s514 = sand.u32 %s153, 1
        %s515 = scalar_lea.sflag [#allocation4], %s514
        %s516 = sand.u32 %s153, 1
        %s517 = smul.addr %s516, 64
        %s518 = scalar_lea.vmem [#allocation7], %s517
        // Predicated region
        $region49: #{tpu_custom_call.1} parent=39 // pred_check
          %p519 = pneg %p163
        $region50: #{tpu_custom_call.1} parent=39 // pred_check_branch
          %521 = sbr.rel (%p519) target = $region52
        $region51: #{tpu_custom_call.1} parent=39 // pred_region
          %s522 = smul.u32 2, %s25
          %s524 = ssub.s32 1024, 1024
          %525 = vsyncadd %s515, %s524
          %s526 = smul.addr %s522, 128
          %s527 = scalar_lea.hbm %s5, %s526
          %s528 = sshll.u32 %s518, 4
          %s529 = int_to_ptr.vmem [resolvable:$true] %s528
          %534 = dma.vmem_to_hbm [thread:$0]  %s529, 1024, %s527, %s515, 256, 512, 16
        $region52: #{tpu_custom_call.1} parent=39 // pred_fallthru
          _
      $region40: #{tpu_custom_call.1} parent=5 // pred_fallthru
        _
      %p535 = scmp.le.s32.totalorder 2, %s20
      // Predicated region
      $region53: #{tpu_custom_call.1} parent=5 // pred_check
        %p536 = pneg %p535
      $region54: #{tpu_custom_call.1} parent=5 // pred_check_branch
        %538 = sbr.rel (%p536) target = $region56
      $region55: #{tpu_custom_call.1} parent=5 // pred_region
        %s539 = ssub.s32 %s20, 2
        // Predicated region
        $region57: #{tpu_custom_call.1} parent=55 // pred_check
          %p540 = pneg %p169
        $region58: #{tpu_custom_call.1} parent=55 // pred_check_branch
          %542 = sbr.rel (%p540) target = $region60
        $region59: #{tpu_custom_call.1} parent=55 // pred_region
          %s543 = sand.u32 %s154, 1
          %s544 = scalar_lea.sflag [#allocation4], %s543
          %s545 = sand.u32 %s154, 1
          %s546 = smul.addr %s545, 64
          %s547 = scalar_lea.vmem [#allocation7], %s546
          %548 = dma.done %s544, 1024
        $region60: #{tpu_custom_call.1} parent=55 // pred_fallthru
          _
      $region56: #{tpu_custom_call.1} parent=5 // pred_fallthru
        _
    $region6: #{tpu_custom_call.1} parent=1 // loop_footer
      %s24 = sadd.s32 1, %s20
    $region7: #{tpu_custom_call.1} parent=1 // loop_footer_branch
      %19 = sbr.rel target = $region3
    $region8: #{tpu_custom_call.1} parent=1 // loop_exit
      _
    %549 = vsyncpa [#allocation3], 1
    %s550 = scalar_lea.sflag [#allocation3], 1
    %551 = vsyncpa %s550, 1
    %552 = vsyncpa [#allocation6], 1
    %s553 = scalar_lea.sflag [#allocation6], 1
    %554 = vsyncpa %s553, 1
    %555 = vsyncpa [#allocation4], 1
    %s556 = scalar_lea.sflag [#allocation4], 1
    %557 = vsyncpa %s556, 1

</llo_original>
